<compile_context>
chip_gen: v5e
topology: v5e:2x2
jax: 0.10.0
libtpu: 0.0.40
codegen_flags: <defaults>
</compile_context>

<pallas_src>
import jax
import jax.numpy as jnp
from jax.experimental import pallas as pl
from jax.experimental.pallas import tpu as pltpu


_LANE = 128                            # full vreg lane width; unmasked stores
_TARGET_TILE_BYTES = 4 * 1024 * 1024   # ~4 MiB tile: DMA-bound on v5e/v6e/v7x
_VMEM_LIMIT_BYTES = 32 * 1024 * 1024   # 2 specs * 2 bufs * 4 MiB = 16 MiB + headroom


def _copy_kernel(x_ref, o_ref):
    # Identity copy of the current (tile_rows, 128) tile.
    o_ref[...] = x_ref[...]


def _ceil_to(a, b):
    return (a + b - 1) // b * b


def _pallas_identity_copy(x2d, tile_rows, true_bytes):
    """Tiled lane-dense identity copy of a (rows, 128) slab into a fresh buffer."""
    rows, lane = x2d.shape
    return pl.pallas_call(
        _copy_kernel,
        out_shape=jax.ShapeDtypeStruct((rows, lane), x2d.dtype),
        grid_spec=pltpu.PrefetchScalarGridSpec(
            num_scalar_prefetch=0,
            grid=(pl.cdiv(rows, tile_rows),),          # partial last block OK
            in_specs=[pl.BlockSpec((tile_rows, lane), lambda i: (i, 0))],
            out_specs=pl.BlockSpec((tile_rows, lane), lambda i: (i, 0)),
        ),
        compiler_params=pltpu.CompilerParams(
            dimension_semantics=("parallel",),          # megacore splits the grid
            vmem_limit_bytes=_VMEM_LIMIT_BYTES,
        ),
        # Pure streaming copy: no flops, one read + one write of the real data.
        cost_estimate=pl.CostEstimate(
            flops=0, transcendentals=0, bytes_accessed=2 * true_bytes
        ),
    )(x2d)


class ReshapeLayer:
    """JAX/Pallas equivalent of the PyTorch ReshapeLayer (x.view(*shape))."""

    def __init__(self, *args, materialize=False):
        self.shape = args
        self.materialize = materialize

    def __call__(self, x):
        if not self.materialize:
            # torch .view on a contiguous tensor is metadata-only: zero cost.
            # This is the production path; keep materialize=True out of hot loops.
            return jnp.reshape(x, self.shape)

        # Materialized copy through the Pallas kernel (fresh HBM buffer).
        total = int(x.size)
        itemsize = jnp.dtype(x.dtype).itemsize
        # Sublane multiple so packed dtypes keep dense stores:
        # 8 for 4-byte, 16 for 2-byte, 32 for 1-byte dtypes.
        sub = max(8, 32 // itemsize)

        flat = jnp.reshape(x, (-1,))
        padded = _ceil_to(total, _LANE)
        if padded != total:
            # TODO(synk): <128-elem tail handled via pad+slice; a manual
            # make_async_copy of the exact byte count would avoid these copies.
            flat = jnp.pad(flat, (0, padded - total))
        rows = padded // _LANE
        x2d = jnp.reshape(flat, (rows, _LANE))

        target_rows = max(sub, (_TARGET_TILE_BYTES // (_LANE * itemsize)) // sub * sub)
        if rows <= target_rows:
            if rows >= 2 * sub:
                # Split into ~2 blocks so both v7x TensorCores stream DMAs.
                tile_rows = _ceil_to(pl.cdiv(rows, 2), sub)
            else:
                tile_rows = rows        # block == full array dims -> always legal
        else:
            tile_rows = target_rows     # multiple of `sub`, ~4 MiB tile

        out2d = _pallas_identity_copy(x2d, tile_rows, total * itemsize)

        out_flat = jnp.reshape(out2d, (-1,))
        if padded != total:
            out_flat = out_flat[:total]
        # view(*shape): row-major metadata reshape, same element order as torch.
        return jnp.reshape(out_flat, self.shape)


if __name__ == "__main__":
    key = jax.random.PRNGKey(0)

    # Input consistent with a VAE decoder-entry reshape: (B, C, H, W) -> (B, C*H*W).
    x = jax.random.normal(key, (2, 4, 16, 16), dtype=jnp.float32)
    ref = jnp.reshape(x, (2, 4 * 16 * 16))

    # Default path: pure metadata reshape (what torch .view actually does).
    fast = ReshapeLayer(2, 4 * 16 * 16)
    y_fast = jax.block_until_ready(fast(x))
    assert y_fast.shape == (2, 1024) and y_fast.dtype == x.dtype
    assert bool(jnp.all(y_fast == ref))

    # Materialized path: total=2048 -> rows=16, grid=2 (exercises the TC split).
    mat = ReshapeLayer(2, 4 * 16 * 16, materialize=True)
    y = jax.block_until_ready(mat(x))
    assert y.shape == (2, 1024) and y.dtype == x.dtype
    assert bool(jnp.all(y == ref))

    # Non-aligned element count + bf16: exercises the <128-elem pad tail.
    x2 = jax.random.normal(jax.random.PRNGKey(0), (3, 5, 7), dtype=jnp.bfloat16)
    layer2 = ReshapeLayer(105, materialize=True)
    y2 = jax.block_until_ready(layer2(x2))
    assert y2.shape == (105,) and y2.dtype == x2.dtype
    assert bool(jnp.all(y2 == jnp.reshape(x2, (105,))))

    # Row count not a multiple of the tile: exercises the partial last block.
    x3 = jax.random.normal(jax.random.PRNGKey(0), (17, 128), dtype=jnp.float32)
    layer3 = ReshapeLayer(17 * 128, materialize=True)
    y3 = jax.block_until_ready(layer3(x3))
    assert y3.shape == (17 * 128,) and y3.dtype == x3.dtype
    assert bool(jnp.all(y3 == jnp.reshape(x3, (17 * 128,))))

    print("KERNEL_OK")
</pallas_src>

<mosaic_0001>
module attributes {stable_mosaic.version = 11 : i64} {
  func.func @_copy_kernel(%arg0: i32, %arg1: memref<8x128xf32, #tpu.memory_space<vmem>>, %arg2: memref<8x128xf32, #tpu.memory_space<vmem>>) attributes {dimension_semantics = [#tpu.dimension_semantics<parallel>], iteration_bounds = array<i64: 2>, scalar_prefetch = 0 : i64, scratch_operands = 0 : i64, tpu.core_type = #tpu.core_type<tc>, window_params = [{transform_indices = @transform_0, window_bounds = array<i64: 8, 128>}, {transform_indices = @transform_1, window_bounds = array<i64: 8, 128>}]} {
    %c0 = arith.constant 0 : index
    %c0_0 = arith.constant 0 : index
    %0 = vector.load %arg1[%c0, %c0_0] : memref<8x128xf32, #tpu.memory_space<vmem>>, vector<8x128xf32>
    %c0_1 = arith.constant 0 : index
    %c0_2 = arith.constant 0 : index
    %1 = vector.load %arg2[%c0_1, %c0_2] : memref<8x128xf32, #tpu.memory_space<vmem>>, vector<8x128xf32>
    tpu.vector_store %arg2[%c0_1, %c0_2], %0 {strides = array<i32>} : memref<8x128xf32, #tpu.memory_space<vmem>>, vector<8x128xf32>,
    return
  }
  func.func @transform_0(%arg0: i32) -> (i32, i32) {
    %c0_i32 = arith.constant 0 : i32
    %c0_i32_0 = arith.constant 0 : i32
    return %arg0, %c0_i32 : i32, i32
  }
  func.func @transform_1(%arg0: i32) -> (i32, i32) {
    %c0_i32 = arith.constant 0 : i32
    %c0_i32_0 = arith.constant 0 : i32
    return %arg0, %c0_i32 : i32, i32
  }
}

</mosaic_0001>

<llo_original>
// kernel: tpu_custom_call.1
$region0: #{tpu_custom_call.1}
  #allocation0 [shape = 'u32[]', space=smem, size = 0x4, offset = 0x4, fixed_abs, tag = 'smem constant byte address 0x4 - core index']
  #allocation1 [shape = 'u32[72,128]{1,0:T(1,128)}', space=vmem, size = 0x9000, scoped, tag = 'internal scratch']
  %s0 = inlined_call_operand.hbm [shape: f32[16,128], index: 0, kind: input, shape index: {}]
  %s1 = inlined_call_operand.hbm [shape: f32[16,128], index: 1, kind: output, shape index: {}]
  %s2 = sld [smem:[#allocation0]]
  $region41: #{tpu_custom_call.1} parent=0
    _
  %s4 = ssub.s32 1, %s2
  %s5 = scalar_select 0, %s4, %s2
  $region1: #{tpu_custom_call.1} parent=0
    #allocation2 [shape = 'u8[8192]{0}', space=vmem, size = 0x2000, scoped, tag = 'input window, operand 0']
    #allocation3 [shape = 's32[2]{0}', space=sflag, size = 0x8, scoped, tag = 'scoped memory for tpu_custom_call.1']
    #allocation4 [shape = 's32[2]{0}', space=sflag, size = 0x8, scoped, tag = 'scoped memory for tpu_custom_call.1']
    #allocation5 [shape = 'u8[8192]{0}', space=vmem, size = 0x2000, scoped, tag = 'output window, operand 0']
    %6 = vsyncpa [#allocation3], 0
    %s7 = scalar_lea.sflag [#allocation3], 1
    %8 = vsyncpa %s7, 0
    %9 = vsyncpa [#allocation4], 0
    %s10 = scalar_lea.sflag [#allocation4], 1
    %11 = vsyncpa %s10, 0
    loop: start=0, step=1, limit=4
    $region2: #{tpu_custom_call.1} parent=1 // loop_pre_header
      _
    $region3: #{tpu_custom_call.1} parent=1 // loop_header
      %s13 = sphi 0, %s17
      %p14 = scmp.ge.s32.totalorder %s13, 4
      %s23 = sphi 0, %s25
      %s26 = sphi 0, %s23
      %s27 = sphi 0, %s26
      %s43 = sphi 0, %s27
      %s49 = sphi 0, %s51
      %s52 = sphi 0, %s49
      %s53 = sphi 0, %s52
      %s69 = sphi 0, %s53
    $region4: #{tpu_custom_call.1} parent=1 // loop_header_branch
      %16 = sbr.rel (%p14) target = $region8
    $region5: #{tpu_custom_call.1} parent=1 // loop_body
      %s18 = ssub.s32 %s13, 1
      %s19 = ssub.s32 %s13, 2
      %s20 = sadd.s32 %s13, 1
      %s21 = ssub.s32 %s13, %s20
      %p22 = scmp.eq.s32.totalorder %s21, 0
      %s24 = sadd.s32 %s23, 1
      %s25 = scalar_select %p22, %s23, %s24
      %p28 = pneg %p22
      %p29 = scmp.eq.s32.totalorder %s13, 1
      %p30 = por %p28, %p29
      %p31 = scmp.ne.s32.totalorder %s23, %s26
      %p32 = scmp.eq.s32.totalorder %s13, 0
      %p33 = por %p31, %p32
      %p34 = scmp.ne.s32.totalorder %s23, %s26
      %p35 = scmp.eq.s32.totalorder %s18, 1
      %p36 = por %p34, %p35
      %p37 = scmp.ne.s32.totalorder %s26, %s27
      %p38 = scmp.eq.s32.totalorder %s18, 0
      %p39 = por %p37, %p38
      %p40 = scmp.ne.s32.totalorder %s26, %s27
      %p41 = scmp.eq.s32.totalorder %s19, 1
      %p42 = por %p40, %p41
      %p44 = scmp.ne.s32.totalorder %s27, %s43
      %p45 = scmp.eq.s32.totalorder %s19, 0
      %p46 = por %p44, %p45
      %s47 = ssub.s32 %s13, %s20
      %p48 = scmp.eq.s32.totalorder %s47, 0
      %s50 = sadd.s32 %s49, 1
      %s51 = scalar_select %p48, %s49, %s50
      %p54 = pneg %p48
      %p55 = scmp.eq.s32.totalorder %s13, 1
      %p56 = por %p54, %p55
      %p57 = scmp.ne.s32.totalorder %s49, %s52
      %p58 = scmp.eq.s32.totalorder %s13, 0
      %p59 = por %p57, %p58
      %p60 = scmp.ne.s32.totalorder %s49, %s52
      %p61 = scmp.eq.s32.totalorder %s18, 1
      %p62 = por %p60, %p61
      %p63 = scmp.ne.s32.totalorder %s52, %s53
      %p64 = scmp.eq.s32.totalorder %s18, 0
      %p65 = por %p63, %p64
      %p66 = scmp.ne.s32.totalorder %s52, %s53
      %p67 = scmp.eq.s32.totalorder %s19, 1
      %p68 = por %p66, %p67
      %p70 = scmp.ne.s32.totalorder %s53, %s69
      %p71 = scmp.eq.s32.totalorder %s19, 0
      %p72 = por %p70, %p71
      %p73 = scmp.le.s32.totalorder 1, %s13
      %p74 = scmp.lt.s32.totalorder %s13, 3
      %p75 = pnand %p73, %p74
      %p76 = pneg %p75
      // Predicated region
      $region9: #{tpu_custom_call.1} parent=5 // pred_check
        _
      $region10: #{tpu_custom_call.1} parent=5 // pred_check_branch
        %78 = sbr.rel (%p75) target = $region12
      $region11: #{tpu_custom_call.1} parent=5 // pred_region
        %s79 = ssub.s32 %s13, 1
      $region12: #{tpu_custom_call.1} parent=5 // pred_fallthru
        _
      %p80 = scmp.lt.s32.totalorder %s13, 2
      // Predicated region
      $region13: #{tpu_custom_call.1} parent=5 // pred_check
        %p81 = pneg %p80
      $region14: #{tpu_custom_call.1} parent=5 // pred_check_branch
        %83 = sbr.rel (%p81) target = $region16
      $region15: #{tpu_custom_call.1} parent=5 // pred_region
        // Predicated region
        $region17: #{tpu_custom_call.1} parent=15 // pred_check
          %p84 = pneg %p33
        $region18: #{tpu_custom_call.1} parent=15 // pred_check_branch
          %86 = sbr.rel (%p84) target = $region20
        $region19: #{tpu_custom_call.1} parent=15 // pred_region
          %s87 = sand.u32 %s23, 1
          %s88 = scalar_lea.sflag [#allocation3], %s87
          %s89 = sand.u32 %s23, 1
          %s90 = smul.addr %s89, 8
          %s91 = scalar_lea.vmem [#allocation2], %s90
          %93 = vsyncadd %s88, 0
          %s94 = smul.addr %s13, 8
          %s95 = scalar_lea.hbm %s0, %s94
          %s97 = sshll.u32 %s95, 4
          %s98 = int_to_ptr.hbm [resolvable:$true] %s97
          %s99 = sshll.u32 %s91, 4
          %s100 = int_to_ptr.vmem [resolvable:$true] %s99
          %102 = dma.hbm_to_vmem [thread:$0]  %s98, 128, %s100, %s88
        $region20: #{tpu_custom_call.1} parent=15 // pred_fallthru
          _
      $region16: #{tpu_custom_call.1} parent=5 // pred_fallthru
        _
      %p103 = scmp.le.s32.totalorder 1, %s13
      %p104 = scmp.lt.s32.totalorder %s13, 3
      %p105 = pnand %p103, %p104
      %p106 = pneg %p105
      // Predicated region
      $region21: #{tpu_custom_call.1} parent=5 // pred_check
        _
      $region22: #{tpu_custom_call.1} parent=5 // pred_check_branch
        %108 = sbr.rel (%p105) target = $region24
      $region23: #{tpu_custom_call.1} parent=5 // pred_region
        %s109 = ssub.s32 %s13, 1
        %s110 = sand.u32 %s26, 1
        %s111 = scalar_lea.sflag [#allocation3], %s110
        %s112 = sand.u32 %s26, 1
        %s113 = smul.addr %s112, 8
        %s114 = scalar_lea.vmem [#allocation2], %s113
        // Predicated region
        $region25: #{tpu_custom_call.1} parent=23 // pred_check
          %p115 = pneg %p39
        $region26: #{tpu_custom_call.1} parent=23 // pred_check_branch
          %117 = sbr.rel (%p115) target = $region28
        $region27: #{tpu_custom_call.1} parent=23 // pred_region
          %119 = dma.done %s111, 128
        $region28: #{tpu_custom_call.1} parent=23 // pred_fallthru
          _
        %s120 = sand.u32 %s26, 1
        %s121 = scalar_lea.sflag [#allocation3], %s120
        %s122 = sand.u32 %s26, 1
        %s123 = smul.addr %s122, 8
        %s124 = scalar_lea.vmem [#allocation2], %s123
        %p125 = pneg %p39
        %p126 = pneg %p36
        %p127 = pneg %p65
        %p128 = pneg %p62
        %s129 = sand.u32 %s52, 1
        %s130 = scalar_lea.sflag [#allocation4], %s129
        %s131 = sand.u32 %s52, 1
        %s132 = smul.addr %s131, 8
        %s133 = scalar_lea.vmem [#allocation5], %s132
        %v134 = vld [vmem:[%s114] sm:$0xff]
        %135 = vst [vmem:[%s133] sm:$0xff] %v134
        %s136 = sand.u32 %s52, 1
        %s137 = scalar_lea.sflag [#allocation4], %s136
        %s138 = sand.u32 %s52, 1
        %s139 = smul.addr %s138, 8
        %s140 = scalar_lea.vmem [#allocation5], %s139
        // Predicated region
        $region29: #{tpu_custom_call.1} parent=23 // pred_check
          %p141 = pneg %p62
        $region30: #{tpu_custom_call.1} parent=23 // pred_check_branch
          %143 = sbr.rel (%p141) target = $region32
        $region31: #{tpu_custom_call.1} parent=23 // pred_region
          %145 = vsyncadd %s137, 0
          %s146 = smul.addr %s18, 8
          %s147 = scalar_lea.hbm %s1, %s146
          %s149 = sshll.u32 %s140, 4
          %s150 = int_to_ptr.vmem [resolvable:$true] %s149
          %s151 = sshll.u32 %s147, 4
          %s152 = int_to_ptr.hbm [resolvable:$true] %s151
          %154 = dma.vmem_to_hbm [thread:$0]  %s150, 128, %s152, %s137
        $region32: #{tpu_custom_call.1} parent=23 // pred_fallthru
          _
      $region24: #{tpu_custom_call.1} parent=5 // pred_fallthru
        _
      %p155 = scmp.le.s32.totalorder 2, %s13
      // Predicated region
      $region33: #{tpu_custom_call.1} parent=5 // pred_check
        %p156 = pneg %p155
      $region34: #{tpu_custom_call.1} parent=5 // pred_check_branch
        %158 = sbr.rel (%p156) target = $region36
      $region35: #{tpu_custom_call.1} parent=5 // pred_region
        %s159 = ssub.s32 %s13, 2
        // Predicated region
        $region37: #{tpu_custom_call.1} parent=35 // pred_check
          %p160 = pneg %p68
        $region38: #{tpu_custom_call.1} parent=35 // pred_check_branch
          %162 = sbr.rel (%p160) target = $region40
        $region39: #{tpu_custom_call.1} parent=35 // pred_region
          %s163 = sand.u32 %s53, 1
          %s164 = scalar_lea.sflag [#allocation4], %s163
          %s165 = sand.u32 %s53, 1
          %s166 = smul.addr %s165, 8
          %s167 = scalar_lea.vmem [#allocation5], %s166
          %169 = dma.done %s164, 128
        $region40: #{tpu_custom_call.1} parent=35 // pred_fallthru
          _
      $region36: #{tpu_custom_call.1} parent=5 // pred_fallthru
        _
    $region6: #{tpu_custom_call.1} parent=1 // loop_footer
      %s17 = sadd.s32 1, %s13
    $region7: #{tpu_custom_call.1} parent=1 // loop_footer_branch
      %12 = sbr.rel target = $region3
    $region8: #{tpu_custom_call.1} parent=1 // loop_exit
      _
    %170 = vsyncpa [#allocation3], 1
    %s171 = scalar_lea.sflag [#allocation3], 1
    %172 = vsyncpa %s171, 1
    %173 = vsyncpa [#allocation4], 1
    %s174 = scalar_lea.sflag [#allocation4], 1
    %175 = vsyncpa %s174, 1

</llo_original>
